<compile_context>
chip_gen: v5e
topology: v5e:2x2
jax: 0.10.0
libtpu: 0.0.40
codegen_flags: <defaults>
</compile_context>

<pallas_src>
import numpy as np
import jax
import jax.numpy as jnp
from jax import lax
from jax.experimental import pallas as pl
from jax.experimental.pallas import tpu as pltpu


# ----------------------------------------------------------------------------
# Elementwise action kernels (lane-dense [rows, 128] layout, [1, C] operands)
# ----------------------------------------------------------------------------
def _make_map_action_kernel(bound):
    def kernel(a_ref, scale_ref, offset_ref, o_ref):
        a = a_ref[...].astype(jnp.float32)
        if bound == "clip":
            a = jnp.clip(a, -1.0, 1.0)            # torch.clamp(action, -1, 1)
        elif bound == "tanh":
            a = jnp.tanh(a)                       # torch.tanh(action)
        # low + (high-low)*(a+1)/2  ==  offset + scale*a   (folded in wrapper)
        o_ref[...] = (offset_ref[...] + scale_ref[...] * a).astype(o_ref.dtype)
    return kernel


def _make_map_action_inverse_kernel(use_atanh):
    def kernel(a_ref, scale_ref, offset_ref, o_ref):
        a = a_ref[...].astype(jnp.float32)
        # 2*(a - low)/(high - low) - 1  ==  a*inv_scale + offset
        a = offset_ref[...] + scale_ref[...] * a
        if use_atanh:  # action_bound_method == 'tanh'
            eps = 1e-6
            a = jnp.clip(a, -1.0 + eps, 1.0 - eps)          # avoid +/-inf at boundary
            a = 0.5 * (jnp.log(1.0 + a) - jnp.log(1.0 - a))  # exact atanh (matches torch)
        o_ref[...] = a.astype(o_ref.dtype)
    return kernel


def _affine_elementwise(kernel, action, scale, offset, *, max_block_rows=1024):
    """Run `kernel` over action with per-action-dim scale/offset, lane-dense."""
    B, A = action.shape
    dtype = action.dtype
    scale = scale.astype(jnp.float32)
    offset = offset.astype(jnp.float32)

    if A <= 128:
        # pad action dim to the smallest divisor of 128 so the per-dim pattern
        # repeats exactly within one 128-lane row (free when A already divides 128)
        A_pad = next(d for d in (1, 2, 4, 8, 16, 32, 64, 128) if d >= A)
        C = 128
        reps = 128 // A_pad
    else:
        # wide action vectors: keep [B, A_pad] layout, action dim on lanes
        A_pad = ((A + 127) // 128) * 128
        C = A_pad
        reps = 1

    if A_pad != A:
        action = jnp.pad(action, ((0, 0), (0, A_pad - A)))
        scale = jnp.pad(scale, (0, A_pad - A), constant_values=1.0)
        offset = jnp.pad(offset, (0, A_pad - A), constant_values=0.0)

    scale_row = jnp.tile(scale, reps).reshape(1, C)
    offset_row = jnp.tile(offset, reps).reshape(1, C)

    if A <= 128:
        flat = action.reshape(-1)                 # row-major flatten: free reshape
        n = flat.shape[0]
        R = pl.cdiv(n, C)
        if R * C != n:
            flat = jnp.pad(flat, (0, R * C - n))
        x2d = flat.reshape(R, C)
    else:
        x2d = action
        R = B

    if R <= max_block_rows:
        br, R_pad = R, R                          # single full-array block
    else:
        br = max_block_rows                       # multiple of 8 -> dense (8,128) vregs
        R_pad = pl.cdiv(R, br) * br
        if R_pad != R:
            x2d = jnp.pad(x2d, ((0, R_pad - R), (0, 0)))

    out2d = pl.pallas_call(
        kernel,
        grid=(R_pad // br,),
        out_shape=jax.ShapeDtypeStruct((R_pad, C), dtype),
        in_specs=[
            pl.BlockSpec((br, C), lambda i: (i, 0)),
            pl.BlockSpec((1, C), lambda i: (0, 0)),
            pl.BlockSpec((1, C), lambda i: (0, 0)),
        ],
        out_specs=pl.BlockSpec((br, C), lambda i: (i, 0)),
        compiler_params=pltpu.CompilerParams(dimension_semantics=("parallel",)),
    )(x2d, scale_row, offset_row)

    if A <= 128:
        out = out2d.reshape(-1)[: B * A_pad].reshape(B, A_pad)
    else:
        out = out2d[:R]
    return out[:, :A]


def map_action(action, low, high, action_bound_method="clip", *, max_block_rows=1024):
    low32 = low.astype(jnp.float32)
    high32 = high.astype(jnp.float32)
    scale = (high32 - low32) * 0.5                # fold bounds once in the wrapper
    offset = low32 + scale
    return _affine_elementwise(
        _make_map_action_kernel(action_bound_method), action, scale, offset,
        max_block_rows=max_block_rows)


def map_action_inverse(action, low, high, action_bound_method="clip", *,
                       max_block_rows=1024):
    low32 = low.astype(jnp.float32)
    high32 = high.astype(jnp.float32)
    # per-dim reciprocal computed once (A divides, not B*A)
    inv_scale = 2.0 / (high32 - low32)            # TODO(synk): undefined if high == low (matches reference)
    offset = -low32 * inv_scale - 1.0
    return _affine_elementwise(
        _make_map_action_inverse_kernel(action_bound_method == "tanh"),
        action, inv_scale, offset, max_block_rows=max_block_rows)


# ----------------------------------------------------------------------------
# compute_episode_return: fully fused GAE (prologue + backward scan + epilogue)
# in one pallas_call; all data lives in SMEM (T is small in RL rollouts).
# ----------------------------------------------------------------------------
def _make_gae_kernel(T, gamma, gae_lambda, unroll):
    gl = gamma * gae_lambda

    def kernel(rew_ref, val_ref, vnext_ref, end_ref, reset_ref, adv_ref, ret_ref):
        def body(j, adv):
            i = T - 1 - j                                      # reverse time
            v = val_ref[i]
            delta = rew_ref[i] + gamma * vnext_ref[i] - v      # fused prologue
            coef = (1.0 - end_ref[i]) * gl * (1.0 - reset_ref[i])
            adv = delta + coef * adv                           # serial recurrence
            adv_ref[i] = adv
            ret_ref[i] = adv + v                               # fused epilogue
            return adv

        lax.fori_loop(0, T, body, jnp.float32(0.0), unroll=unroll)

    return kernel


def compute_episode_return(reward, values, values_next, terminated, truncated,
                           episode_end_mask, gamma=0.99, gae_lambda=0.95):
    T = reward.shape[0]
    rew = reward.astype(jnp.float32)
    val = values.astype(jnp.float32)
    vnext = values_next.astype(jnp.float32)
    end_flag = jnp.logical_or(terminated, truncated).astype(jnp.float32)
    reset = episode_end_mask.astype(jnp.float32)

    # cap unroll for long rollouts (instruction-stream / compile-time bloat)
    unroll = True if T <= 128 else 8
    # TODO(synk): for T in the many-thousands, switch to a blocked lane-parallel
    # scan on VMEM tiles with a serial chunk-carry combine.

    smem = lambda: pl.BlockSpec(memory_space=pltpu.MemorySpace.SMEM)
    advantages, returns = pl.pallas_call(
        _make_gae_kernel(T, float(gamma), float(gae_lambda), unroll),
        grid=(1,),
        out_shape=(jax.ShapeDtypeStruct((T,), jnp.float32),
                   jax.ShapeDtypeStruct((T,), jnp.float32)),
        in_specs=[smem(), smem(), smem(), smem(), smem()],
        out_specs=(smem(), smem()),
        compiler_params=pltpu.CompilerParams(dimension_semantics=("arbitrary",)),
    )(rew, val, vnext, end_flag, reset)
    return returns, advantages


# ----------------------------------------------------------------------------
# numpy references (mirror the PyTorch / numpy code exactly)
# ----------------------------------------------------------------------------
def _ref_map_action(a, low, high):
    a = np.clip(a, -1.0, 1.0)
    return low + (high - low) * (a + 1.0) / 2.0


def _ref_map_action_inverse(a, low, high):
    return 2.0 * (a - low) / (high - low) - 1.0


def _ref_gae(reward, values, values_next, terminated, truncated, end_positions,
             gamma, lam):
    end_flag = np.logical_or(terminated, truncated)
    advantages = np.zeros_like(reward)
    delta = reward + gamma * values_next - values
    discount = (1.0 - end_flag) * (gamma * lam)
    adv = 0.0
    for i in range(len(reward) - 1, -1, -1):
        if i in end_positions:
            adv = 0.0
        adv = delta[i] + discount[i] * adv
        advantages[i] = adv
    returns = advantages + values
    return returns, advantages


if __name__ == "__main__":
    key = jax.random.PRNGKey(0)
    k_a, k_r, k_v, k_t, k_b = jax.random.split(key, 5)

    # --- "parameters": deterministic continuous action-space bounds ---------
    B, A = 256, 4
    low = jnp.full((A,), -2.0, dtype=jnp.float32)
    high = jnp.array([1.0, 2.0, 3.0, 4.0], dtype=jnp.float32)

    # raw policy output (pre-bound), large enough that clipping matters
    action = jax.random.normal(k_a, (B, A), dtype=jnp.float32) * 1.5

    mapped = jax.block_until_ready(map_action(action, low, high))
    inv = jax.block_until_ready(map_action_inverse(mapped, low, high))
    inv_tanh = jax.block_until_ready(
        map_action_inverse(mapped, low, high, action_bound_method="tanh"))

    # odd sizes to exercise the padding paths (A doesn't divide 128, B*A < 128)
    B2, A2 = 5, 3
    low2 = jnp.array([-1.0, -3.0, 0.0], dtype=jnp.float32)
    high2 = jnp.array([1.0, 3.0, 2.0], dtype=jnp.float32)
    action2 = jax.random.normal(k_b, (B2, A2), dtype=jnp.float32) * 1.5
    mapped2 = jax.block_until_ready(map_action(action2, low2, high2))

    # --- rollout for compute_episode_return ---------------------------------
    T = 16
    reward = jax.random.normal(k_r, (T,), dtype=jnp.float32)
    values_next = jax.random.normal(k_v, (T,), dtype=jnp.float32)
    values = jnp.roll(values_next, 1)                   # default: np.roll(values_next, 1)
    terminated = jax.random.uniform(k_t, (T,)) < 0.2
    truncated = jnp.zeros((T,), dtype=bool)
    end_positions = {7}                                 # batch._episode_end_position
    end_mask = jnp.array([1.0 if i in end_positions else 0.0 for i in range(T)],
                         dtype=jnp.float32)

    returns, advantages = jax.block_until_ready(
        compute_episode_return(reward, values, values_next, terminated, truncated,
                               end_mask, gamma=0.99, gae_lambda=0.95))

    # --- verify against numpy references -------------------------------------
    np_mapped = _ref_map_action(np.asarray(action), np.asarray(low), np.asarray(high))
    np_inv = _ref_map_action_inverse(np_mapped, np.asarray(low), np.asarray(high))
    np_mapped2 = _ref_map_action(np.asarray(action2), np.asarray(low2), np.asarray(high2))
    np_ret, np_adv = _ref_gae(np.asarray(reward), np.asarray(values),
                              np.asarray(values_next), np.asarray(terminated),
                              np.asarray(truncated), end_positions, 0.99, 0.95)

    assert np.allclose(np.asarray(mapped), np_mapped, atol=1e-5)
    assert np.allclose(np.asarray(inv), np_inv, atol=1e-5)
    assert np.allclose(np.asarray(mapped2), np_mapped2, atol=1e-5)

    # tanh-bound inverse: exact two-log atanh in the interior, finite at the
    # clipped boundary.
    np_norm = np.clip(np_inv, -1.0 + 1e-6, 1.0 - 1e-6)
    np_atanh = np.arctanh(np_norm)
    interior = np.abs(np_norm) < 0.999
    assert np.all(np.isfinite(np.asarray(inv_tanh)))
    assert np.allclose(np.asarray(inv_tanh)[interior], np_atanh[interior],
                       atol=1e-4, rtol=1e-4)

    assert np.allclose(np.asarray(advantages), np_adv, atol=1e-4)
    assert np.allclose(np.asarray(returns), np_ret, atol=1e-4)

    # TODO(synk): forward/get_action/learn/process_rollout are abstract in
    # BaseAgent (no concrete network), so there is no matmul/conv hot path to port.
    print("KERNEL_OK")
</pallas_src>

<mosaic_0001>
module attributes {stable_mosaic.version = 11 : i64} {
  func.func @kernel(%arg0: i32, %arg1: memref<8x128xf32, #tpu.memory_space<vmem>>, %arg2: memref<1x128xf32, #tpu.memory_space<vmem>>, %arg3: memref<1x128xf32, #tpu.memory_space<vmem>>, %arg4: memref<8x128xf32, #tpu.memory_space<vmem>>) attributes {dimension_semantics = [#tpu.dimension_semantics<parallel>], iteration_bounds = array<i64: 1>, scalar_prefetch = 0 : i64, scratch_operands = 0 : i64, tpu.core_type = #tpu.core_type<tc>, window_params = [{transform_indices = @transform_0, window_bounds = array<i64: 8, 128>}, {pipeline_mode = #tpu.pipeline_mode<synchronous>, transform_indices = @transform_1, window_bounds = array<i64: 1, 128>}, {pipeline_mode = #tpu.pipeline_mode<synchronous>, transform_indices = @transform_2, window_bounds = array<i64: 1, 128>}, {transform_indices = @transform_3, window_bounds = array<i64: 8, 128>}]} {
    %c0 = arith.constant 0 : index
    %c0_0 = arith.constant 0 : index
    %0 = vector.load %arg1[%c0, %c0_0] : memref<8x128xf32, #tpu.memory_space<vmem>>, vector<8x128xf32>
    %cst = arith.constant -1.000000e+00 : f32
    %cst_1 = arith.constant 1.000000e+00 : f32
    %1 = vector.broadcast %cst : f32 to vector<8x128xf32>
    %2 = arith.maximumf %1, %0 : vector<8x128xf32>
    %3 = vector.broadcast %cst_1 : f32 to vector<8x128xf32>
    %4 = arith.minimumf %3, %2 : vector<8x128xf32>
    %c0_2 = arith.constant 0 : index
    %c0_3 = arith.constant 0 : index
    %5 = vector.load %arg3[%c0_2, %c0_3] : memref<1x128xf32, #tpu.memory_space<vmem>>, vector<1x128xf32>
    %c0_4 = arith.constant 0 : index
    %c0_5 = arith.constant 0 : index
    %6 = vector.load %arg2[%c0_4, %c0_5] : memref<1x128xf32, #tpu.memory_space<vmem>>, vector<1x128xf32>
    %7 = vector.broadcast %6 : vector<1x128xf32> to vector<8x128xf32>
    %8 = arith.mulf %7, %4 : vector<8x128xf32>
    %9 = vector.broadcast %5 : vector<1x128xf32> to vector<8x128xf32>
    %10 = arith.addf %9, %8 : vector<8x128xf32>
    %c0_6 = arith.constant 0 : index
    %c0_7 = arith.constant 0 : index
    %11 = vector.load %arg4[%c0_6, %c0_7] : memref<8x128xf32, #tpu.memory_space<vmem>>, vector<8x128xf32>
    tpu.vector_store %arg4[%c0_6, %c0_7], %10 {strides = array<i32>} : memref<8x128xf32, #tpu.memory_space<vmem>>, vector<8x128xf32>,
    return
  }
  func.func @transform_0(%arg0: i32) -> (i32, i32) {
    %c0_i32 = arith.constant 0 : i32
    %c0_i32_0 = arith.constant 0 : i32
    return %arg0, %c0_i32 : i32, i32
  }
  func.func @transform_1(%arg0: i32) -> (i32, i32) {
    %c0_i32 = arith.constant 0 : i32
    %c0_i32_0 = arith.constant 0 : i32
    %c0_i32_1 = arith.constant 0 : i32
    return %c0_i32, %c0_i32_0 : i32, i32
  }
  func.func @transform_2(%arg0: i32) -> (i32, i32) {
    %c0_i32 = arith.constant 0 : i32
    %c0_i32_0 = arith.constant 0 : i32
    %c0_i32_1 = arith.constant 0 : i32
    return %c0_i32, %c0_i32_0 : i32, i32
  }
  func.func @transform_3(%arg0: i32) -> (i32, i32) {
    %c0_i32 = arith.constant 0 : i32
    %c0_i32_0 = arith.constant 0 : i32
    return %arg0, %c0_i32 : i32, i32
  }
}

</mosaic_0001>

<llo_original>
// kernel: tpu_custom_call.1
$region0: #{tpu_custom_call.1}
  #allocation0 [shape = 'u32[]', space=smem, size = 0x4, offset = 0x4, fixed_abs, tag = 'smem constant byte address 0x4 - core index']
  #allocation1 [shape = 'u32[72,128]{1,0:T(1,128)}', space=vmem, size = 0x9000, scoped, tag = 'internal scratch']
  %s0 = inlined_call_operand.hbm [shape: f32[8,128], index: 0, kind: input, shape index: {}]
  %s1 = inlined_call_operand.hbm [shape: f32[1,128], index: 1, kind: input, shape index: {}]
  %s2 = inlined_call_operand.vmem [shape: f32[1,128], index: 2, kind: input, shape index: {}]
  %s3 = inlined_call_operand.hbm [shape: f32[8,128], index: 3, kind: output, shape index: {}]
  %s4 = sld [smem:[#allocation0]]
  $region30: #{tpu_custom_call.1} parent=0
    _
  %s6 = ssub.s32 1, %s4
  %s7 = scalar_select 0, %s6, %s4
  $region1: #{tpu_custom_call.1} parent=0
    #allocation2 [shape = 'u8[4096]{0}', space=vmem, size = 0x1000, scoped, tag = 'input window, operand 0, single buffered']
    #allocation3 [shape = 's32[1]{0}', space=sflag, size = 0x4, scoped, tag = 'scoped memory for tpu_custom_call.1']
    #allocation4 [shape = 's32[1]{0}', space=sflag, size = 0x4, scoped, tag = 'scoped memory for tpu_custom_call.1']
    #allocation5 [shape = 'u8[512]{0}', space=vmem, size = 0x400, scoped, tag = 'input window, operand 1, single buffered']
    #allocation6 [shape = 's32[1]{0}', space=sflag, size = 0x4, scoped, tag = 'scoped memory for tpu_custom_call.1']
    #allocation7 [shape = 'u8[4096]{0}', space=vmem, size = 0x1000, scoped, tag = 'output window, operand 0, single buffered']
    %8 = vsyncpa [#allocation3], 0
    %9 = vsyncpa [#allocation6], 0
    %10 = vsyncpa [#allocation4], 0
    // Predicated region
    $region2: #{tpu_custom_call.1} parent=1 // pred_check
      _
    $region3: #{tpu_custom_call.1} parent=1 // pred_check_branch
      %12 = sbr.rel (0) target = $region5
    $region4: #{tpu_custom_call.1} parent=1 // pred_region
      %14 = vsyncadd [#allocation3], 0
      %s16 = sshll.u32 %s0, 4
      %s17 = int_to_ptr.hbm [resolvable:$true] %s16
      %s18 = sshll.u32 [#allocation2], 4
      %s19 = int_to_ptr.vmem [resolvable:$true] %s18
      %21 = dma.hbm_to_vmem [thread:$0]  %s17, 128, %s19, [#allocation3]
    $region5: #{tpu_custom_call.1} parent=1 // pred_fallthru
      _
    // Predicated region
    $region6: #{tpu_custom_call.1} parent=1 // pred_check
      _
    $region7: #{tpu_custom_call.1} parent=1 // pred_check_branch
      %23 = sbr.rel (0) target = $region9
    $region8: #{tpu_custom_call.1} parent=1 // pred_region
      %25 = vsyncadd [#allocation6], 0
      %s27 = sshll.u32 %s1, 4
      %s28 = int_to_ptr.hbm [resolvable:$true] %s27
      %s29 = sshll.u32 [#allocation5], 4
      %s30 = int_to_ptr.vmem [resolvable:$true] %s29
      %32 = dma.hbm_to_vmem [thread:$0]  %s28, 16, %s30, [#allocation6]
    $region9: #{tpu_custom_call.1} parent=1 // pred_fallthru
      _
    // Predicated region
    $region10: #{tpu_custom_call.1} parent=1 // pred_check
      _
    $region11: #{tpu_custom_call.1} parent=1 // pred_check_branch
      %34 = sbr.rel (0) target = $region13
    $region12: #{tpu_custom_call.1} parent=1 // pred_region
      _
    $region13: #{tpu_custom_call.1} parent=1 // pred_fallthru
      _
    // Predicated region
    $region14: #{tpu_custom_call.1} parent=1 // pred_check
      _
    $region15: #{tpu_custom_call.1} parent=1 // pred_check_branch
      %36 = sbr.rel (0) target = $region17
    $region16: #{tpu_custom_call.1} parent=1 // pred_region
      %38 = dma.done [#allocation3], 128
    $region17: #{tpu_custom_call.1} parent=1 // pred_fallthru
      _
    // Predicated region
    $region18: #{tpu_custom_call.1} parent=1 // pred_check
      _
    $region19: #{tpu_custom_call.1} parent=1 // pred_check_branch
      %40 = sbr.rel (0) target = $region21
    $region20: #{tpu_custom_call.1} parent=1 // pred_region
      %42 = dma.done [#allocation6], 16
    $region21: #{tpu_custom_call.1} parent=1 // pred_fallthru
      _
    %v43 = vld [vmem:[#allocation2] sm:$0xff]
    %v44 = vmax.f32 %v43, -1.0
    %v45 = vmin.f32 %v44, 1.0
    %v46 = vld [vmem:[%s2] sm:$0x1]
    %v47 = vld [vmem:[#allocation5] sm:$0x1]
    %v49 = vperm.slane %v47, 0
    %v51 = vmul.f32 %v49, %v45
    %v53 = vperm.slane %v46, 0
    %v55 = vadd.f32 %v53, %v51
    %56 = vst [vmem:[#allocation7] sm:$0xff] %v55
    // Predicated region
    $region22: #{tpu_custom_call.1} parent=1 // pred_check
      _
    $region23: #{tpu_custom_call.1} parent=1 // pred_check_branch
      %58 = sbr.rel (0) target = $region25
    $region24: #{tpu_custom_call.1} parent=1 // pred_region
      %60 = vsyncadd [#allocation4], 0
      %s62 = sshll.u32 [#allocation7], 4
      %s63 = int_to_ptr.vmem [resolvable:$true] %s62
      %s64 = sshll.u32 %s3, 4
      %s65 = int_to_ptr.hbm [resolvable:$true] %s64
      %67 = dma.vmem_to_hbm [thread:$0]  %s63, 128, %s65, [#allocation4]
    $region25: #{tpu_custom_call.1} parent=1 // pred_fallthru
      _
    // Predicated region
    $region26: #{tpu_custom_call.1} parent=1 // pred_check
      _
    $region27: #{tpu_custom_call.1} parent=1 // pred_check_branch
      %69 = sbr.rel (0) target = $region29
    $region28: #{tpu_custom_call.1} parent=1 // pred_region
      %71 = dma.done [#allocation4], 128
    $region29: #{tpu_custom_call.1} parent=1 // pred_fallthru
      _
    %72 = vsyncpa [#allocation3], 1
    %73 = vsyncpa [#allocation6], 1
    %74 = vsyncpa [#allocation4], 1

</llo_original>
